<compile_context>
chip_gen: v5e
topology: v5e:2x2
jax: 0.10.0
libtpu: 0.0.40
codegen_flags: <defaults>
</compile_context>

<pallas_src>
import functools

import jax
import jax.numpy as jnp
from jax.experimental import pallas as pl
from jax.experimental.pallas import tpu as pltpu


# --------------------------------------------------------------------------- #
# Kernel
# --------------------------------------------------------------------------- #
def _dbrx_grouped_kernel(block_gid_ref, x_ref, gate_ref, w1t_ref, v1t_ref,
                         w2_ref, out_ref, acc_ref):
    """One (row-block, ffn-tile) grid step of the grouped DBRX expert GLU."""
    del block_gid_ref  # consumed only by the index_maps (scalar prefetch)
    f = pl.program_id(1)

    @pl.when(f == 0)
    def _():
        acc_ref[...] = jnp.zeros_like(acc_ref)

    x = x_ref[...]                                            # (T_t, H)  bf16
    # Pre-transposed gate/up weights -> plain MXU contractions, no in-kernel
    # transpose of the bf16 weight tiles.
    gate_proj = jnp.dot(x, w1t_ref[...], preferred_element_type=jnp.float32)
    up_proj = jnp.dot(x, v1t_ref[...], preferred_element_type=jnp.float32)
    # silu (default DBRX ffn_act_fn) in f32, cast to bf16 for the down matmul.
    inter = ((gate_proj * jax.nn.sigmoid(gate_proj)) * up_proj).astype(jnp.bfloat16)
    acc_ref[...] += jnp.dot(inter, w2_ref[...],
                            preferred_element_type=jnp.float32)

    @pl.when(f == pl.num_programs(1) - 1)
    def _():
        # Per-row routing weight applied ONCE to the f32 accumulator — matches
        # the PyTorch `expert_out * top_weights[token_list, topk_list, None]`.
        out_ref[...] = (acc_ref[...] * gate_ref[...]).astype(out_ref.dtype)


# --------------------------------------------------------------------------- #
# Helpers
# --------------------------------------------------------------------------- #
def _round_up(x, m):
    return ((x + m - 1) // m) * m


def _choose_div_tile(dim, preferred, align):
    """Largest multiple of `align` that divides `dim` and is <= preferred."""
    preferred = max(1, min(preferred, dim))
    align = max(1, min(align, preferred))
    if dim <= preferred:
        return dim
    t = (preferred // align) * align
    while t >= align:
        if dim % t == 0:
            return t
        t -= align
    t = (preferred // 8) * 8
    while t >= 8:
        if dim % t == 0:
            return t
        t -= 8
    return dim


def _tpu_defaults():
    """Generation-specific tile defaults and VMEM capacity (best effort)."""
    kind = ""
    try:
        kind = jax.devices()[0].device_kind.lower()
    except Exception:
        pass
    vmem_cap = 64 << 20
    try:
        vmem_cap = int(getattr(pltpu.get_tpu_info(), "vmem_capacity_bytes",
                               vmem_cap))
    except Exception:
        pass
    if "v5 lite" in kind or "v5e" in kind or "v5lite" in kind:
        # v5e: roofline crossover ~240 flop/byte -> T_t=256 already compute
        # bound; MXU is 4x128x128 so 128-aligned ffn tiles suffice.
        return dict(token_tile=256, ffn_tile=512, f_align=128, vmem_cap=vmem_cap)
    if "v6" in kind:
        # v6e: ~650 flop/byte crossover -> larger token tiles; 256-aligned F.
        return dict(token_tile=768, ffn_tile=512, f_align=256, vmem_cap=vmem_cap)
    # v7x (64 MiB VMEM) and unknown chips: conservative tiles.
    return dict(token_tile=512, ffn_tile=256, f_align=256, vmem_cap=vmem_cap)


def _vmem_estimate(t_t, f_t, h, out_itemsize, weight_bufs):
    return (2 * t_t * h * 2                        # x tile (bf16, dbl-buffered)
            + 2 * t_t * 128 * 4                    # gate tile (lane-padded f32)
            + weight_bufs * 2 * h * f_t * 2        # w1^T + v1^T tiles (bf16)
            + weight_bufs * f_t * h * 2            # w2 tile (bf16)
            + 2 * t_t * h * out_itemsize           # output tile
            + t_t * h * 4)                         # f32 accumulator scratch


def _mk_weight_spec(block_shape, index_map, buffer_count):
    # TODO(synk): on v5e/v6e (128 MiB VMEM) set buffer_count=3 to deepen the
    # weight-stream pipeline (do NOT on v7x's 64 MiB).
    if buffer_count is not None and buffer_count > 2:
        try:
            return pl.BlockSpec(block_shape, index_map,
                                pipeline_mode=pl.Buffered(buffer_count))
        except TypeError:
            pass
    return pl.BlockSpec(block_shape, index_map)


# --------------------------------------------------------------------------- #
# Wrapper: DbrxExperts.forward
# --------------------------------------------------------------------------- #
def dbrx_experts_forward(x, weights, top_weights, top_experts, w1, v1, w2,
                         moe_num_experts, ffn_hidden_size, *,
                         token_tile=None, ffn_tile=None,
                         weight_buffer_count=2):
    """Pallas implementation of DbrxExperts.forward.

    x:            (bsz, q_len, hidden)
    weights:      (T, moe_num_experts) router probs (unused, parity w/ torch)
    top_weights:  (T, top_k)
    top_experts:  (T, top_k) int32
    w1, v1, w2:   (moe_num_experts * ffn_hidden, hidden)
    """
    del weights  # not used by the PyTorch forward either
    bsz, q_len, H = x.shape
    T = bsz * q_len
    E = moe_num_experts
    F = ffn_hidden_size
    K = top_weights.shape[-1]
    rows = T * K
    out_dtype = x.dtype

    cfg = _tpu_defaults()
    if token_tile is None:
        token_tile = cfg["token_tile"]
    if ffn_tile is None:
        ffn_tile = cfg["ffn_tile"]
    f_align = cfg["f_align"]
    budget = max(cfg["vmem_cap"] - (8 << 20), 16 << 20)   # capacity-aware

    # --- tile selection (MXU-friendly alignment, shrink to VMEM budget) -----
    F_t = _choose_div_tile(F, ffn_tile, f_align)
    T_t = min(token_tile, _round_up(rows, 16))
    T_t = _round_up(T_t, 128) if T_t >= 128 else _round_up(T_t, 16)
    out_isize = jnp.dtype(out_dtype).itemsize
    wbufs = max(2, weight_buffer_count or 2)
    for _ in range(8):
        if _vmem_estimate(T_t, F_t, H, out_isize, wbufs) <= budget:
            break
        new_f = _choose_div_tile(F, max(F_t // 2, 8),
                                 min(f_align, max(F_t // 2, 8)))
        if new_f < F_t:
            F_t = new_f
        elif T_t > 16:
            T_t = max(16, _round_up(T_t // 2, 16))
        else:
            break
    num_f = F // F_t

    # Static upper bound on row blocks: sum_e cdiv(g_e, T_t) <= rows//T_t + E.
    num_blocks = rows // T_t + min(E, rows)
    rows_pad = num_blocks * T_t

    # --- group (token, k) assignments by expert (megablocks-style) ----------
    flat_experts = top_experts.reshape(rows).astype(jnp.int32)
    flat_gates = top_weights.reshape(rows).astype(jnp.float32)
    flat_tokens = (jnp.arange(rows, dtype=jnp.int32) // K)

    order = jnp.argsort(flat_experts)
    sorted_experts = flat_experts[order]
    sorted_tokens = flat_tokens[order]
    sorted_gates = flat_gates[order]

    group_sizes = jnp.sum(
        flat_experts[:, None] == jnp.arange(E, dtype=jnp.int32)[None, :],
        axis=0).astype(jnp.int32)                              # (E,)
    blocks_per_group = (group_sizes + T_t - 1) // T_t
    padded_sizes = blocks_per_group * T_t
    padded_offsets = jnp.concatenate(
        [jnp.zeros((1,), jnp.int32), jnp.cumsum(padded_sizes)[:-1]]).astype(jnp.int32)
    group_offsets = jnp.concatenate(
        [jnp.zeros((1,), jnp.int32), jnp.cumsum(group_sizes)[:-1]]).astype(jnp.int32)

    pos_in_group = jnp.arange(rows, dtype=jnp.int32) - group_offsets[sorted_experts]
    dest = padded_offsets[sorted_experts] + pos_in_group       # unique, < rows_pad

    tok_grouped = jnp.zeros((rows_pad,), jnp.int32).at[dest].set(sorted_tokens)
    gate_grouped = jnp.zeros((rows_pad,), jnp.float32).at[dest].set(sorted_gates)
    gate_grouped = gate_grouped[:, None]                       # (rows_pad, 1)

    # Per-row-block expert id (0 for unused trailing blocks; their gate is 0).
    block_first = padded_offsets // T_t
    b_idx = jnp.arange(num_blocks, dtype=jnp.int32)
    in_grp = ((b_idx[:, None] >= block_first[None, :]) &
              (b_idx[:, None] < (block_first + blocks_per_group)[None, :]))
    block_group = jnp.argmax(in_grp, axis=1).astype(jnp.int32)  # (num_blocks,)

    # --- operand prep: cast / relayout ONCE in the wrapper -------------------
    x2d = x.reshape(T, H).astype(jnp.bfloat16)
    x_grouped = jnp.take(x2d, tok_grouped, axis=0)             # (rows_pad, H)
    # One-time HBM relayout of gate/up weights to (E, H, F); do at load time
    # in production.  TODO(synk): optional fp8 weight quantization on v7x.
    w1t = jnp.transpose(w1.reshape(E, F, H).astype(jnp.bfloat16), (0, 2, 1))
    v1t = jnp.transpose(v1.reshape(E, F, H).astype(jnp.bfloat16), (0, 2, 1))
    w2e = w2.reshape(E, F, H).astype(jnp.bfloat16)

    vmem_est = _vmem_estimate(T_t, F_t, H, out_isize, wbufs)
    vmem_limit = int(min(max(vmem_est + (4 << 20), 32 << 20), budget))
    vmem_limit = max(vmem_limit, min(vmem_est, budget))

    grid_spec = pltpu.PrefetchScalarGridSpec(
        num_scalar_prefetch=1,
        grid=(num_blocks, num_f),
        in_specs=[
            pl.BlockSpec((T_t, H), lambda b, f, gid: (b, 0)),   # grouped x rows
            pl.BlockSpec((T_t, 1), lambda b, f, gid: (b, 0)),   # per-row gate
            _mk_weight_spec((None, H, F_t),
                            lambda b, f, gid: (gid[b], 0, f),
                            weight_buffer_count),               # w1^T[e] tile
            _mk_weight_spec((None, H, F_t),
                            lambda b, f, gid: (gid[b], 0, f),
                            weight_buffer_count),               # v1^T[e] tile
            _mk_weight_spec((None, F_t, H),
                            lambda b, f, gid: (gid[b], f, 0),
                            weight_buffer_count),               # w2[e] tile
        ],
        out_specs=pl.BlockSpec((T_t, H), lambda b, f, gid: (b, 0)),
        scratch_shapes=[pltpu.VMEM((T_t, H), jnp.float32)],
    )

    out_sorted = pl.pallas_call(
        _dbrx_grouped_kernel,
        out_shape=jax.ShapeDtypeStruct((rows_pad, H), out_dtype),
        grid_spec=grid_spec,
        compiler_params=pltpu.CompilerParams(
            dimension_semantics=("parallel", "arbitrary"),
            vmem_limit_bytes=vmem_limit),
    )(block_group, x_grouped, gate_grouped, w1t, v1t, w2e)

    # Scatter-add each (token, k) contribution back to its token (f32), like
    # torch index_add_.  Padded rows have gate 0 -> contribute exactly zero.
    out2d = jnp.zeros((T, H), jnp.float32).at[tok_grouped].add(
        out_sorted.astype(jnp.float32))
    return out2d.astype(out_dtype).reshape(bsz, q_len, H)


# --------------------------------------------------------------------------- #
# Pure-JAX reference mirroring the PyTorch loop (same bf16 casts as kernel)
# --------------------------------------------------------------------------- #
def _reference_forward(x, top_weights, top_experts, w1, v1, w2, E, F):
    bsz, q_len, H = x.shape
    T = bsz * q_len
    x2d = x.reshape(T, H).astype(jnp.bfloat16)
    w1e = w1.reshape(E, F, H).astype(jnp.bfloat16)
    v1e = v1.reshape(E, F, H).astype(jnp.bfloat16)
    w2e = w2.reshape(E, F, H).astype(jnp.bfloat16)
    out = jnp.zeros((T, H), jnp.float32)
    for e in range(E):
        gp = jnp.dot(x2d, w1e[e].T, preferred_element_type=jnp.float32)
        up = jnp.dot(x2d, v1e[e].T, preferred_element_type=jnp.float32)
        inter = ((gp * jax.nn.sigmoid(gp)) * up).astype(jnp.bfloat16)
        down = jnp.dot(inter, w2e[e], preferred_element_type=jnp.float32)
        gate_e = jnp.sum(
            top_weights.astype(jnp.float32) * (top_experts == e).astype(jnp.float32),
            axis=-1)
        out = out + down * gate_e[:, None]
    return out.reshape(bsz, q_len, H).astype(x.dtype)


if __name__ == "__main__":
    # Small DBRX-like config (lane-aligned hidden; multiple row/ffn blocks).
    bsz, q_len = 2, 16
    hidden_size = 128
    ffn_hidden_size = 256
    moe_num_experts = 4
    top_k = 2
    T = bsz * q_len

    key = jax.random.PRNGKey(0)
    kx, kw1, kv1, kw2, kr = jax.random.split(key, 5)

    x = jax.random.normal(kx, (bsz, q_len, hidden_size), dtype=jnp.float32)
    w1 = 0.05 * jax.random.normal(
        kw1, (moe_num_experts * ffn_hidden_size, hidden_size), dtype=jnp.float32)
    v1 = 0.05 * jax.random.normal(
        kv1, (moe_num_experts * ffn_hidden_size, hidden_size), dtype=jnp.float32)
    w2 = 0.05 * jax.random.normal(
        kw2, (moe_num_experts * ffn_hidden_size, hidden_size), dtype=jnp.float32)

    # Router: softmax over experts, take top-k (matches DbrxRouter output).
    router_logits = jax.random.normal(kr, (T, moe_num_experts), dtype=jnp.float32)
    weights = jax.nn.softmax(router_logits, axis=-1)
    top_weights, top_experts = jax.lax.top_k(weights, top_k)
    top_experts = top_experts.astype(jnp.int32)

    fwd = functools.partial(
        dbrx_experts_forward,
        moe_num_experts=moe_num_experts,
        ffn_hidden_size=ffn_hidden_size,
        token_tile=32,   # small demo tiles so the (row-block, ffn) grid is exercised
        ffn_tile=128,
    )
    out = fwd(x, weights, top_weights, top_experts, w1, v1, w2)
    out = jax.block_until_ready(out)

    ref = _reference_forward(x, top_weights, top_experts, w1, v1, w2,
                             moe_num_experts, ffn_hidden_size)
    assert out.shape == (bsz, q_len, hidden_size)
    err = float(jnp.max(jnp.abs(out.astype(jnp.float32) - ref.astype(jnp.float32))))
    assert err < 5e-4, err
    print("KERNEL_OK")
</pallas_src>

<mosaic_0001>
module attributes {stable_mosaic.version = 11 : i64} {
  func.func @_dbrx_grouped_kernel(%arg0: i32, %arg1: i32, %arg2: memref<6xi32, #tpu.memory_space<smem>>, %arg3: memref<32x128xbf16, #tpu.memory_space<vmem>>, %arg4: memref<32x1xf32, #tpu.memory_space<vmem>>, %arg5: memref<1x128x128xbf16, #tpu.memory_space<vmem>>, %arg6: memref<1x128x128xbf16, #tpu.memory_space<vmem>>, %arg7: memref<1x128x128xbf16, #tpu.memory_space<vmem>>, %arg8: memref<32x128xf32, #tpu.memory_space<vmem>>, %arg9: memref<32x128xf32, #tpu.memory_space<vmem>>) attributes {dimension_semantics = [#tpu.dimension_semantics<parallel>, #tpu.dimension_semantics<arbitrary>], iteration_bounds = array<i64: 6, 2>, scalar_prefetch = 1 : i64, scratch_operands = 1 : i64, tpu.core_type = #tpu.core_type<tc>, window_params = [{transform_indices = @transform_0, window_bounds = array<i64: 32, 128>}, {transform_indices = @transform_1, window_bounds = array<i64: 32, 1>}, {transform_indices = @transform_2, window_bounds = array<i64: 1, 128, 128>}, {transform_indices = @transform_3, window_bounds = array<i64: 1, 128, 128>}, {transform_indices = @transform_4, window_bounds = array<i64: 1, 128, 128>}, {transform_indices = @transform_5, window_bounds = array<i64: 32, 128>}]} {
    %c0_i32 = arith.constant 0 : i32
    %0 = arith.cmpi eq, %arg1, %c0_i32 : i32
    %1 = arith.extui %0 : i1 to i32
    %c0_i32_0 = arith.constant 0 : i32
    %2 = arith.cmpi ne, %1, %c0_i32_0 : i32
    scf.if %2 {
      %cst_19 = arith.constant 0.000000e+00 : f32
      %27 = vector.broadcast %cst_19 : f32 to vector<32x128xf32>
      %c0_20 = arith.constant 0 : index
      %c0_21 = arith.constant 0 : index
      %28 = vector.load %arg9[%c0_20, %c0_21] : memref<32x128xf32, #tpu.memory_space<vmem>>, vector<32x128xf32>
      tpu.vector_store %arg9[%c0_20, %c0_21], %27 {strides = array<i32>} : memref<32x128xf32, #tpu.memory_space<vmem>>, vector<32x128xf32>,
    } else {
    }
    %c0 = arith.constant 0 : index
    %c0_1 = arith.constant 0 : index
    %3 = vector.load %arg3[%c0, %c0_1] : memref<32x128xbf16, #tpu.memory_space<vmem>>, vector<32x128xbf16>
    %c0_2 = arith.constant 0 : index
    %c0_3 = arith.constant 0 : index
    %c0_4 = arith.constant 0 : index
    %4 = vector.load %arg5[%c0_2, %c0_3, %c0_4] : memref<1x128x128xbf16, #tpu.memory_space<vmem>>, vector<1x128x128xbf16>
    %5 = vector.shape_cast %4 : vector<1x128x128xbf16> to vector<128x128xbf16>
    %cst = arith.constant dense<0.000000e+00> : vector<32x128xf32>
    %6 = tpu.matmul %3, %5, %cst {dimension_numbers = #tpu.dot_dimension_numbers<[1], [0], [0], [1], [0, 0, 1, 1], [], []>} : vector<32x128xbf16>, vector<128x128xbf16>, vector<32x128xf32> -> vector<32x128xf32>
    %c0_5 = arith.constant 0 : index
    %c0_6 = arith.constant 0 : index
    %c0_7 = arith.constant 0 : index
    %7 = vector.load %arg6[%c0_5, %c0_6, %c0_7] : memref<1x128x128xbf16, #tpu.memory_space<vmem>>, vector<1x128x128xbf16>
    %8 = vector.shape_cast %7 : vector<1x128x128xbf16> to vector<128x128xbf16>
    %cst_8 = arith.constant dense<0.000000e+00> : vector<32x128xf32>
    %9 = tpu.matmul %3, %8, %cst_8 {dimension_numbers = #tpu.dot_dimension_numbers<[1], [0], [0], [1], [0, 0, 1, 1], [], []>} : vector<32x128xbf16>, vector<128x128xbf16>, vector<32x128xf32> -> vector<32x128xf32>
    %10 = arith.negf %6 : vector<32x128xf32>
    %11 = math.exp %10 : vector<32x128xf32>
    %cst_9 = arith.constant 1.000000e+00 : f32
    %12 = vector.broadcast %cst_9 : f32 to vector<32x128xf32>
    %13 = arith.addf %12, %11 : vector<32x128xf32>
    %14 = arith.divf %12, %13 : vector<32x128xf32>
    %15 = arith.mulf %6, %14 : vector<32x128xf32>
    %16 = arith.mulf %15, %9 : vector<32x128xf32>
    %17 = arith.truncf %16 : vector<32x128xf32> to vector<32x128xbf16>
    %c0_10 = arith.constant 0 : index
    %c0_11 = arith.constant 0 : index
    %18 = vector.load %arg9[%c0_10, %c0_11] : memref<32x128xf32, #tpu.memory_space<vmem>>, vector<32x128xf32>
    %c0_12 = arith.constant 0 : index
    %c0_13 = arith.constant 0 : index
    %c0_14 = arith.constant 0 : index
    %19 = vector.load %arg7[%c0_12, %c0_13, %c0_14] : memref<1x128x128xbf16, #tpu.memory_space<vmem>>, vector<1x128x128xbf16>
    %20 = vector.shape_cast %19 : vector<1x128x128xbf16> to vector<128x128xbf16>
    %cst_15 = arith.constant dense<0.000000e+00> : vector<32x128xf32>
    %21 = tpu.matmul %17, %20, %cst_15 {dimension_numbers = #tpu.dot_dimension_numbers<[1], [0], [0], [1], [0, 0, 1, 1], [], []>} : vector<32x128xbf16>, vector<128x128xbf16>, vector<32x128xf32> -> vector<32x128xf32>
    %22 = arith.addf %18, %21 : vector<32x128xf32>
    %c0_16 = arith.constant 0 : index
    %c0_17 = arith.constant 0 : index
    %23 = vector.load %arg9[%c0_16, %c0_17] : memref<32x128xf32, #tpu.memory_space<vmem>>, vector<32x128xf32>
    tpu.vector_store %arg9[%c0_16, %c0_17], %22 {strides = array<i32>} : memref<32x128xf32, #tpu.memory_space<vmem>>, vector<32x128xf32>,
    %c1_i32 = arith.constant 1 : i32
    %24 = arith.cmpi eq, %arg1, %c1_i32 : i32
    %25 = arith.extui %24 : i1 to i32
    %c0_i32_18 = arith.constant 0 : i32
    %26 = arith.cmpi ne, %25, %c0_i32_18 : i32
    scf.if %26 {
      %c0_19 = arith.constant 0 : index
      %c0_20 = arith.constant 0 : index
      %27 = vector.load %arg9[%c0_19, %c0_20] : memref<32x128xf32, #tpu.memory_space<vmem>>, vector<32x128xf32>
      %c0_21 = arith.constant 0 : index
      %c0_22 = arith.constant 0 : index
      %28 = vector.load %arg4[%c0_21, %c0_22] : memref<32x1xf32, #tpu.memory_space<vmem>>, vector<32x1xf32>
      %29 = vector.broadcast %28 : vector<32x1xf32> to vector<32x128xf32>
      %30 = arith.mulf %27, %29 : vector<32x128xf32>
      %c0_23 = arith.constant 0 : index
      %c0_24 = arith.constant 0 : index
      %31 = vector.load %arg8[%c0_23, %c0_24] : memref<32x128xf32, #tpu.memory_space<vmem>>, vector<32x128xf32>
      tpu.vector_store %arg8[%c0_23, %c0_24], %30 {strides = array<i32>} : memref<32x128xf32, #tpu.memory_space<vmem>>, vector<32x128xf32>,
    } else {
    }
    return
  }
  func.func @transform_0(%arg0: i32, %arg1: i32, %arg2: memref<6xi32, #tpu.memory_space<smem>>) -> (i32, i32) {
    %c0_i32 = arith.constant 0 : i32
    %c0_i32_0 = arith.constant 0 : i32
    return %arg0, %c0_i32 : i32, i32
  }
  func.func @transform_1(%arg0: i32, %arg1: i32, %arg2: memref<6xi32, #tpu.memory_space<smem>>) -> (i32, i32) {
    %c0_i32 = arith.constant 0 : i32
    %c0_i32_0 = arith.constant 0 : i32
    return %arg0, %c0_i32 : i32, i32
  }
  func.func @transform_2(%arg0: i32, %arg1: i32, %arg2: memref<6xi32, #tpu.memory_space<smem>>) -> (i32, i32, i32) {
    %0 = arith.index_cast %arg0 : i32 to index
    %1 = memref.load %arg2[%0] : memref<6xi32, #tpu.memory_space<smem>>
    %c0_i32 = arith.constant 0 : i32
    %c0_i32_0 = arith.constant 0 : i32
    return %1, %c0_i32, %arg1 : i32, i32, i32
  }
  func.func @transform_3(%arg0: i32, %arg1: i32, %arg2: memref<6xi32, #tpu.memory_space<smem>>) -> (i32, i32, i32) {
    %0 = arith.index_cast %arg0 : i32 to index
    %1 = memref.load %arg2[%0] : memref<6xi32, #tpu.memory_space<smem>>
    %c0_i32 = arith.constant 0 : i32
    %c0_i32_0 = arith.constant 0 : i32
    return %1, %c0_i32, %arg1 : i32, i32, i32
  }
  func.func @transform_4(%arg0: i32, %arg1: i32, %arg2: memref<6xi32, #tpu.memory_space<smem>>) -> (i32, i32, i32) {
    %0 = arith.index_cast %arg0 : i32 to index
    %1 = memref.load %arg2[%0] : memref<6xi32, #tpu.memory_space<smem>>
    %c0_i32 = arith.constant 0 : i32
    %c0_i32_0 = arith.constant 0 : i32
    return %1, %arg1, %c0_i32 : i32, i32, i32
  }
  func.func @transform_5(%arg0: i32, %arg1: i32, %arg2: memref<6xi32, #tpu.memory_space<smem>>) -> (i32, i32) {
    %c0_i32 = arith.constant 0 : i32
    %c0_i32_0 = arith.constant 0 : i32
    return %arg0, %c0_i32 : i32, i32
  }
}

</mosaic_0001>

<llo_original>
// kernel: tpu_custom_call.1
$region0: #{tpu_custom_call.1}
  #allocation0 [shape = 'u32[]', space=smem, size = 0x4, offset = 0x4, fixed_abs, tag = 'smem constant byte address 0x4 - core index']
  #allocation1 [shape = 'u32[72,128]{1,0:T(1,128)}', space=vmem, size = 0x9000, scoped, tag = 'internal scratch']
  #allocation2 [shape = 'f32[32,128]{1,0:T(8,128)}', space=vmem, size = 0x4000, scoped, tag = 'scratch operand']
  #allocation3 [shape = 's32[1]{0}', space=sflag, size = 0x4, scoped, tag = 'scoped memory for tpu_custom_call.1']
  #allocation4 [shape = 'u8[512]{0}', space=smem, size = 0x200, scoped, tag = 'prefetched SMEM operand 0']
  %s0 = inlined_call_operand.vmem [shape: s32[6], index: 0, kind: input, shape index: {}]
  %s1 = inlined_call_operand.vmem [shape: bf16[192,128], index: 1, kind: input, shape index: {}]
  %s2 = inlined_call_operand.vmem [shape: f32[192,1], index: 2, kind: input, shape index: {}]
  %s3 = inlined_call_operand.hbm [shape: bf16[4,128,256], index: 3, kind: input, shape index: {}]
  %s4 = inlined_call_operand.hbm [shape: bf16[4,128,256], index: 4, kind: input, shape index: {}]
  %s5 = inlined_call_operand.hbm [shape: bf16[4,256,128], index: 5, kind: input, shape index: {}]
  %s6 = inlined_call_operand.hbm [shape: f32[192,128], index: 6, kind: output, shape index: {}]
  %s7 = sld [smem:[#allocation0]]
  $region73: #{tpu_custom_call.1} parent=0
    _
  %s9 = ssub.s32 1, %s7
  %s10 = scalar_select 0, %s9, %s7
  %s12 = sshll.u32 %s0, 4
  %s13 = int_to_ptr.vmem [resolvable:$true] %s12
  %15 = dma.vmem_to_smem %s13, 16, [#allocation4], [#allocation3]
  %17 = dma.done [#allocation3], 16
  %18 = sfence
  $region1: #{tpu_custom_call.1} parent=0
    #allocation5 [shape = 'u8[65536]{0}', space=vmem, size = 0x10000, scoped, tag = 'input window, operand 3']
    #allocation6 [shape = 's32[2]{0}', space=sflag, size = 0x8, scoped, tag = 'scoped memory for tpu_custom_call.1']
    #allocation7 [shape = 's32[2]{0}', space=sflag, size = 0x8, scoped, tag = 'scoped memory for tpu_custom_call.1']
    #allocation8 [shape = 'u8[65536]{0}', space=vmem, size = 0x10000, scoped, tag = 'input window, operand 4']
    #allocation9 [shape = 's32[2]{0}', space=sflag, size = 0x8, scoped, tag = 'scoped memory for tpu_custom_call.1']
    #allocation10 [shape = 'u8[65536]{0}', space=vmem, size = 0x10000, scoped, tag = 'input window, operand 5']
    #allocation11 [shape = 'u8[32768]{0}', space=vmem, size = 0x8000, scoped, tag = 'output window, operand 0']
    %19 = vsyncpa [#allocation6], 0
    %s20 = scalar_lea.sflag [#allocation6], 1
    %21 = vsyncpa %s20, 0
    %22 = vsyncpa [#allocation9], 0
    %s23 = scalar_lea.sflag [#allocation9], 1
    %24 = vsyncpa %s23, 0
    %25 = vsyncpa [#allocation7], 0
    %s26 = scalar_lea.sflag [#allocation7], 1
    %27 = vsyncpa %s26, 0
    loop: start=0, step=1, limit=14
    $region2: #{tpu_custom_call.1} parent=1 // loop_pre_header
      _
    $region3: #{tpu_custom_call.1} parent=1 // loop_header
      %s29 = sphi 0, %s33
      %p30 = scmp.ge.s32.totalorder %s29, 14
      %s36 = sphi 0, %s48
      %s37 = sphi 0, %s44
      %s38 = sphi 0, %s36
      %s39 = sphi 0, %s37
      %s40 = sphi 0, %s38
      %s41 = sphi 0, %s39
      %s51 = sphi 0, %s53
      %s54 = sphi 0, %s51
      %s55 = sphi 0, %s54
      %s71 = sphi 0, %s55
      %s77 = sphi 0, %s79
      %s80 = sphi 0, %s77
      %s81 = sphi 0, %s80
      %s97 = sphi 0, %s81
      %s107 = sphi 0, %s109
      %s110 = sphi 0, %s107
      %s111 = sphi 0, %s110
      %s127 = sphi 0, %s111
      %s137 = sphi 0, %s139
      %s140 = sphi 0, %s137
      %s141 = sphi 0, %s140
      %s157 = sphi 0, %s141
      %s167 = sphi 0, %s169
      %s170 = sphi 0, %s167
      %s171 = sphi 0, %s170
      %s187 = sphi 0, %s171
      %s193 = sphi 0, %s195
      %s196 = sphi 0, %s193
      %s197 = sphi 0, %s196
      %s213 = sphi 0, %s197
    $region4: #{tpu_custom_call.1} parent=1 // loop_header_branch
      %32 = sbr.rel (%p30) target = $region8
    $region5: #{tpu_custom_call.1} parent=1 // loop_body
      %s34 = ssub.s32 %s29, 1
      %s35 = ssub.s32 %s29, 2
      %s42 = sadd.s32 1, %s37
      %p43 = scmp.ge.s32.totalorder %s42, 2
      %s44 = scalar_select %p43, 0, %s42
      %s45 = sadd.s32 1, %s36
      %s46 = scalar_select %p43, %s45, %s36
      %p47 = scmp.ge.s32.totalorder %s46, 6
      %s48 = scalar_select %p47, 0, %s46
      %s49 = ssub.s32 %s36, %s48
      %p50 = scmp.eq.s32.totalorder %s49, 0
      %s52 = sadd.s32 %s51, 1
      %s53 = scalar_select %p50, %s51, %s52
      %p56 = pneg %p50
      %p57 = scmp.eq.s32.totalorder %s29, 11
      %p58 = por %p56, %p57
      %p59 = scmp.ne.s32.totalorder %s51, %s54
      %p60 = scmp.eq.s32.totalorder %s29, 0
      %p61 = por %p59, %p60
      %p62 = scmp.ne.s32.totalorder %s51, %s54
      %p63 = scmp.eq.s32.totalorder %s34, 11
      %p64 = por %p62, %p63
      %p65 = scmp.ne.s32.totalorder %s54, %s55
      %p66 = scmp.eq.s32.totalorder %s34, 0
      %p67 = por %p65, %p66
      %p68 = scmp.ne.s32.totalorder %s54, %s55
      %p69 = scmp.eq.s32.totalorder %s35, 11
      %p70 = por %p68, %p69
      %p72 = scmp.ne.s32.totalorder %s55, %s71
      %p73 = scmp.eq.s32.totalorder %s35, 0
      %p74 = por %p72, %p73
      %s75 = ssub.s32 %s36, %s48
      %p76 = scmp.eq.s32.totalorder %s75, 0
      %s78 = sadd.s32 %s77, 1
      %s79 = scalar_select %p76, %s77, %s78
      %p82 = pneg %p76
      %p83 = scmp.eq.s32.totalorder %s29, 11
      %p84 = por %p82, %p83
      %p85 = scmp.ne.s32.totalorder %s77, %s80
      %p86 = scmp.eq.s32.totalorder %s29, 0
      %p87 = por %p85, %p86
      %p88 = scmp.ne.s32.totalorder %s77, %s80
      %p89 = scmp.eq.s32.totalorder %s34, 11
      %p90 = por %p88, %p89
      %p91 = scmp.ne.s32.totalorder %s80, %s81
      %p92 = scmp.eq.s32.totalorder %s34, 0
      %p93 = por %p91, %p92
      %p94 = scmp.ne.s32.totalorder %s80, %s81
      %p95 = scmp.eq.s32.totalorder %s35, 11
      %p96 = por %p94, %p95
      %p98 = scmp.ne.s32.totalorder %s81, %s97
      %p99 = scmp.eq.s32.totalorder %s35, 0
      %p100 = por %p98, %p99
      %s101 = sld [smem:[#allocation4 + %s36]]
      %s102 = sld [smem:[#allocation4 + %s48]]
      %s103 = ssub.s32 %s101, %s102
      %s104 = ssub.s32 %s37, %s44
      %s105 = sor.u32 %s103, %s104
      %p106 = scmp.eq.s32.totalorder %s105, 0
      %s108 = sadd.s32 %s107, 1
      %s109 = scalar_select %p106, %s107, %s108
      %p112 = pneg %p106
      %p113 = scmp.eq.s32.totalorder %s29, 11
      %p114 = por %p112, %p113
      %p115 = scmp.ne.s32.totalorder %s107, %s110
      %p116 = scmp.eq.s32.totalorder %s29, 0
      %p117 = por %p115, %p116
      %p118 = scmp.ne.s32.totalorder %s107, %s110
      %p119 = scmp.eq.s32.totalorder %s34, 11
      %p120 = por %p118, %p119
      %p121 = scmp.ne.s32.totalorder %s110, %s111
      %p122 = scmp.eq.s32.totalorder %s34, 0
      %p123 = por %p121, %p122
      %p124 = scmp.ne.s32.totalorder %s110, %s111
      %p125 = scmp.eq.s32.totalorder %s35, 11
      %p126 = por %p124, %p125
      %p128 = scmp.ne.s32.totalorder %s111, %s127
      %p129 = scmp.eq.s32.totalorder %s35, 0
      %p130 = por %p128, %p129
      %s131 = sld [smem:[#allocation4 + %s36]]
      %s132 = sld [smem:[#allocation4 + %s48]]
      %s133 = ssub.s32 %s131, %s132
      %s134 = ssub.s32 %s37, %s44
      %s135 = sor.u32 %s133, %s134
      %p136 = scmp.eq.s32.totalorder %s135, 0
      %s138 = sadd.s32 %s137, 1
      %s139 = scalar_select %p136, %s137, %s138
      %p142 = pneg %p136
      %p143 = scmp.eq.s32.totalorder %s29, 11
      %p144 = por %p142, %p143
      %p145 = scmp.ne.s32.totalorder %s137, %s140
      %p146 = scmp.eq.s32.totalorder %s29, 0
      %p147 = por %p145, %p146
      %p148 = scmp.ne.s32.totalorder %s137, %s140
      %p149 = scmp.eq.s32.totalorder %s34, 11
      %p150 = por %p148, %p149
      %p151 = scmp.ne.s32.totalorder %s140, %s141
      %p152 = scmp.eq.s32.totalorder %s34, 0
      %p153 = por %p151, %p152
      %p154 = scmp.ne.s32.totalorder %s140, %s141
      %p155 = scmp.eq.s32.totalorder %s35, 11
      %p156 = por %p154, %p155
      %p158 = scmp.ne.s32.totalorder %s141, %s157
      %p159 = scmp.eq.s32.totalorder %s35, 0
      %p160 = por %p158, %p159
      %s161 = sld [smem:[#allocation4 + %s36]]
      %s162 = sld [smem:[#allocation4 + %s48]]
      %s163 = ssub.s32 %s161, %s162
      %s164 = ssub.s32 %s37, %s44
      %s165 = sor.u32 %s163, %s164
      %p166 = scmp.eq.s32.totalorder %s165, 0
      %s168 = sadd.s32 %s167, 1
      %s169 = scalar_select %p166, %s167, %s168
      %p172 = pneg %p166
      %p173 = scmp.eq.s32.totalorder %s29, 11
      %p174 = por %p172, %p173
      %p175 = scmp.ne.s32.totalorder %s167, %s170
      %p176 = scmp.eq.s32.totalorder %s29, 0
      %p177 = por %p175, %p176
      %p178 = scmp.ne.s32.totalorder %s167, %s170
      %p179 = scmp.eq.s32.totalorder %s34, 11
      %p180 = por %p178, %p179
      %p181 = scmp.ne.s32.totalorder %s170, %s171
      %p182 = scmp.eq.s32.totalorder %s34, 0
      %p183 = por %p181, %p182
      %p184 = scmp.ne.s32.totalorder %s170, %s171
      %p185 = scmp.eq.s32.totalorder %s35, 11
      %p186 = por %p184, %p185
      %p188 = scmp.ne.s32.totalorder %s171, %s187
      %p189 = scmp.eq.s32.totalorder %s35, 0
      %p190 = por %p188, %p189
      %s191 = ssub.s32 %s36, %s48
      %p192 = scmp.eq.s32.totalorder %s191, 0
      %s194 = sadd.s32 %s193, 1
      %s195 = scalar_select %p192, %s193, %s194
      %p198 = pneg %p192
      %p199 = scmp.eq.s32.totalorder %s29, 11
      %p200 = por %p198, %p199
      %p201 = scmp.ne.s32.totalorder %s193, %s196
      %p202 = scmp.eq.s32.totalorder %s29, 0
      %p203 = por %p201, %p202
      %p204 = scmp.ne.s32.totalorder %s193, %s196
      %p205 = scmp.eq.s32.totalorder %s34, 11
      %p206 = por %p204, %p205
      %p207 = scmp.ne.s32.totalorder %s196, %s197
      %p208 = scmp.eq.s32.totalorder %s34, 0
      %p209 = por %p207, %p208
      %p210 = scmp.ne.s32.totalorder %s196, %s197
      %p211 = scmp.eq.s32.totalorder %s35, 11
      %p212 = por %p210, %p211
      %p214 = scmp.ne.s32.totalorder %s197, %s213
      %p215 = scmp.eq.s32.totalorder %s35, 0
      %p216 = por %p214, %p215
      %p217 = scmp.le.s32.totalorder 1, %s29
      %p218 = scmp.lt.s32.totalorder %s29, 13
      %p219 = pnand %p217, %p218
      %p220 = pneg %p219
      // Predicated region
      $region9: #{tpu_custom_call.1} parent=5 // pred_check
        _
      $region10: #{tpu_custom_call.1} parent=5 // pred_check_branch
        %222 = sbr.rel (%p219) target = $region12
      $region11: #{tpu_custom_call.1} parent=5 // pred_region
        %s223 = ssub.s32 %s29, 1
      $region12: #{tpu_custom_call.1} parent=5 // pred_fallthru
        _
      %p224 = scmp.lt.s32.totalorder %s29, 12
      // Predicated region
      $region13: #{tpu_custom_call.1} parent=5 // pred_check
        %p225 = pneg %p224
      $region14: #{tpu_custom_call.1} parent=5 // pred_check_branch
        %227 = sbr.rel (%p225) target = $region16
      $region15: #{tpu_custom_call.1} parent=5 // pred_region
        // Predicated region
        $region17: #{tpu_custom_call.1} parent=15 // pred_check
          %p228 = pneg %p61
        $region18: #{tpu_custom_call.1} parent=15 // pred_check_branch
          %230 = sbr.rel (%p228) target = $region20
        $region19: #{tpu_custom_call.1} parent=15 // pred_region
          %s231 = smul.u32 4, %s36
          %p232 = scmp.lt.s32.totalorder %s231, 23
          %s233 = scalar_select %p232, %s231, 23
          %s234 = smul.addr %s233, 4
          %s235 = scalar_lea.vmem %s1, %s234
          %s236 = smul.u32 4, %s36
        $region20: #{tpu_custom_call.1} parent=15 // pred_fallthru
          _
        // Predicated region
        $region21: #{tpu_custom_call.1} parent=15 // pred_check
          %p237 = pneg %p87
        $region22: #{tpu_custom_call.1} parent=15 // pred_check_branch
          %239 = sbr.rel (%p237) target = $region24
        $region23: #{tpu_custom_call.1} parent=15 // pred_region
          %s240 = smul.u32 4, %s36
          %p241 = scmp.lt.s32.totalorder %s240, 23
          %s242 = scalar_select %p241, %s240, 23
          %s243 = smul.addr %s242, 8
          %s244 = scalar_lea.vmem %s2, %s243
          %s245 = smul.u32 4, %s36
        $region24: #{tpu_custom_call.1} parent=15 // pred_fallthru
          _
        // Predicated region
        $region25: #{tpu_custom_call.1} parent=15 // pred_check
          %p246 = pneg %p117
        $region26: #{tpu_custom_call.1} parent=15 // pred_check_branch
          %248 = sbr.rel (%p246) target = $region28
        $region27: #{tpu_custom_call.1} parent=15 // pred_region
          %s249 = sand.u32 %s107, 1
          %s250 = scalar_lea.sflag [#allocation6], %s249
          %s251 = sand.u32 %s107, 1
          %s252 = smul.addr %s251, 64
          %s253 = scalar_lea.vmem [#allocation5], %s252
          %s254 = sld [smem:[#allocation4 + %s36]]
          %256 = vsyncadd %s250, 0
          %s257 = smul.addr %s254, 32
          %s258 = sadd.s32 %s37, %s257
          %s259 = smul.addr %s258, 4
          %s260 = scalar_lea.hbm %s3, %s259
          %s261 = sshll.u32 %s260, 4
          %s262 = int_to_ptr.hbm [resolvable:$true] %s261
          %s263 = sshll.u32 %s253, 4
          %s264 = int_to_ptr.vmem [resolvable:$true] %s263
          %269 = dma.hbm_to_vmem [thread:$0]  %s262, 1024, %s264, %s250, 128, 64, 4
        $region28: #{tpu_custom_call.1} parent=15 // pred_fallthru
          _
        // Predicated region
        $region29: #{tpu_custom_call.1} parent=15 // pred_check
          %p270 = pneg %p147
        $region30: #{tpu_custom_call.1} parent=15 // pred_check_branch
          %272 = sbr.rel (%p270) target = $region32
        $region31: #{tpu_custom_call.1} parent=15 // pred_region
          %s273 = sand.u32 %s29, 1
          %s274 = scalar_lea.sflag [#allocation9], %s273
          %s275 = sand.u32 %s137, 1
          %s276 = smul.addr %s275, 64
          %s277 = scalar_lea.vmem [#allocation8], %s276
          %s278 = sld [smem:[#allocation4 + %s36]]
          %280 = vsyncadd %s274, 0
          %s281 = smul.addr %s278, 32
          %s282 = sadd.s32 %s37, %s281
          %s283 = smul.addr %s282, 4
          %s284 = scalar_lea.hbm %s4, %s283
          %s285 = sshll.u32 %s284, 4
          %s286 = int_to_ptr.hbm [resolvable:$true] %s285
          %s287 = sshll.u32 %s277, 4
          %s288 = int_to_ptr.vmem [resolvable:$true] %s287
          %293 = dma.hbm_to_vmem [thread:$0]  %s286, 1024, %s288, %s274, 128, 64, 4
        $region32: #{tpu_custom_call.1} parent=15 // pred_fallthru
          _
        // Predicated region
        $region33: #{tpu_custom_call.1} parent=15 // pred_check
          %p294 = pneg %p177
        $region34: #{tpu_custom_call.1} parent=15 // pred_check_branch
          %296 = sbr.rel (%p294) target = $region36
        $region35: #{tpu_custom_call.1} parent=15 // pred_region
          %s297 = sand.u32 %s29, 1
          %s298 = scalar_lea.sflag [#allocation9], %s297
          %s299 = sand.u32 %s167, 1
          %s300 = smul.addr %s299, 64
          %s301 = scalar_lea.vmem [#allocation10], %s300
          %s302 = sld [smem:[#allocation4 + %s36]]
          %s303 = smul.u32 16, %s37
          %305 = vsyncadd %s298, 0
          %s306 = smul.addr %s302, 32
          %s307 = sadd.s32 %s303, %s306
          %s308 = smul.addr %s307, 4
          %s309 = scalar_lea.hbm %s5, %s308
          %s310 = sshll.u32 %s309, 4
          %s311 = int_to_ptr.hbm [resolvable:$true] %s310
          %s312 = sshll.u32 %s301, 4
          %s313 = int_to_ptr.vmem [resolvable:$true] %s312
          %318 = dma.hbm_to_vmem [thread:$0]  %s311, 1024, %s313, %s298, 64, 64, 4
        $region36: #{tpu_custom_call.1} parent=15 // pred_fallthru
          _
      $region16: #{tpu_custom_call.1} parent=5 // pred_fallthru
        _
      %p319 = scmp.le.s32.totalorder 1, %s29
      %p320 = scmp.lt.s32.totalorder %s29, 13
      %p321 = pnand %p319, %p320
      %p322 = pneg %p321
      // Predicated region
      $region37: #{tpu_custom_call.1} parent=5 // pred_check
        _
      $region38: #{tpu_custom_call.1} parent=5 // pred_check_branch
        %324 = sbr.rel (%p321) target = $region40
      $region39: #{tpu_custom_call.1} parent=5 // pred_region
        %s325 = ssub.s32 %s29, 1
        %s326 = sand.u32 %s110, 1
        %s327 = scalar_lea.sflag [#allocation6], %s326
        %s328 = sand.u32 %s110, 1
        %s329 = smul.addr %s328, 64
        %s330 = scalar_lea.vmem [#allocation5], %s329
        // Predicated region
        $region41: #{tpu_custom_call.1} parent=39 // pred_check
          %p331 = pneg %p123
        $region42: #{tpu_custom_call.1} parent=39 // pred_check_branch
          %333 = sbr.rel (%p331) target = $region44
        $region43: #{tpu_custom_call.1} parent=39 // pred_region
          %335 = dma.done %s327, 1024
        $region44: #{tpu_custom_call.1} parent=39 // pred_fallthru
          _
        %s336 = sand.u32 %s34, 1
        %s337 = scalar_lea.sflag [#allocation9], %s336
        %s338 = sand.u32 %s140, 1
        %s339 = smul.addr %s338, 64
        %s340 = scalar_lea.vmem [#allocation8], %s339
        // Predicated region
        $region45: #{tpu_custom_call.1} parent=39 // pred_check
          %p341 = pneg %p153
        $region46: #{tpu_custom_call.1} parent=39 // pred_check_branch
          %343 = sbr.rel (%p341) target = $region48
        $region47: #{tpu_custom_call.1} parent=39 // pred_region
          %345 = dma.done %s337, 1024
        $region48: #{tpu_custom_call.1} parent=39 // pred_fallthru
          _
        %s346 = sand.u32 %s34, 1
        %s347 = scalar_lea.sflag [#allocation9], %s346
        %s348 = sand.u32 %s170, 1
        %s349 = smul.addr %s348, 64
        %s350 = scalar_lea.vmem [#allocation10], %s349
        // Predicated region
        $region49: #{tpu_custom_call.1} parent=39 // pred_check
          %p351 = pneg %p183
        $region50: #{tpu_custom_call.1} parent=39 // pred_check_branch
          %353 = sbr.rel (%p351) target = $region52
        $region51: #{tpu_custom_call.1} parent=39 // pred_region
          %355 = dma.done %s347, 1024
        $region52: #{tpu_custom_call.1} parent=39 // pred_fallthru
          _
        %s356 = smul.u32 4, %s38
        %p357 = scmp.lt.s32.totalorder %s356, 23
        %s358 = scalar_select %p357, %s356, 23
        %s359 = smul.addr %s358, 4
        %s360 = scalar_lea.vmem %s1, %s359
        %p361 = pneg %p67
        %p362 = pneg %p64
        %s363 = smul.u32 4, %s38
        %p364 = scmp.lt.s32.totalorder %s363, 23
        %s365 = scalar_select %p364, %s363, 23
        %s366 = smul.addr %s365, 8
        %s367 = scalar_lea.vmem %s2, %s366
        %p368 = pneg %p93
        %p369 = pneg %p90
        %s370 = sand.u32 %s110, 1
        %s371 = scalar_lea.sflag [#allocation6], %s370
        %s372 = sand.u32 %s110, 1
        %s373 = smul.addr %s372, 64
        %s374 = scalar_lea.vmem [#allocation5], %s373
        %p375 = pneg %p123
        %p376 = pneg %p120
        %s377 = sand.u32 %s34, 1
        %s378 = scalar_lea.sflag [#allocation9], %s377
        %s379 = sand.u32 %s140, 1
        %s380 = smul.addr %s379, 64
        %s381 = scalar_lea.vmem [#allocation8], %s380
        %p382 = pneg %p153
        %p383 = pneg %p150
        %s384 = sand.u32 %s34, 1
        %s385 = scalar_lea.sflag [#allocation9], %s384
        %s386 = sand.u32 %s170, 1
        %s387 = smul.addr %s386, 64
        %s388 = scalar_lea.vmem [#allocation10], %s387
        %p389 = pneg %p183
        %p390 = pneg %p180
        %p391 = pneg %p209
        %p392 = pneg %p206
        %s393 = sand.u32 %s196, 1
        %s394 = scalar_lea.sflag [#allocation7], %s393
        %s395 = sand.u32 %s196, 1
        %s396 = smul.addr %s395, 32
        %s397 = scalar_lea.vmem [#allocation11], %s396
        %s398 = smul.u32 4, %s38
        %p399 = scmp.lt.s32.totalorder %s398, 23
        %s400 = scalar_select %p399, %s398, 23
        %s401 = smul.addr %s400, 4
        %s402 = scalar_lea.vmem %s1, %s401
        %s403 = smul.u32 4, %s38
        %s404 = smul.u32 4, %s38
        %p405 = scmp.lt.s32.totalorder %s404, 23
        %s406 = scalar_select %p405, %s404, 23
        %s407 = smul.addr %s406, 8
        %s408 = scalar_lea.vmem %s2, %s407
        %s409 = smul.u32 4, %s38
        %s410 = sld [smem:[#allocation4 + %s38]]
        %s411 = sld [smem:[#allocation4 + %s38]]
        %s412 = sld [smem:[#allocation4 + %s38]]
        %s413 = smul.u32 16, %s39
        %s414 = smul.u32 4, %s38
        %p415 = scmp.eq.s32.totalorder %s39, 0
        // Predicated region
        $region53: #{tpu_custom_call.1} parent=39 // pred_check
          %p416 = pneg %p415
        $region54: #{tpu_custom_call.1} parent=39 // pred_check_branch
          %418 = sbr.rel (%p416) target = $region56
        $region55: #{tpu_custom_call.1} parent=39 // pred_region
          %419 = vst [vmem:[#allocation2] sm:$0xff] 0.0
          %420 = vst [vmem:[#allocation2 + $0x8] sm:$0xff] 0.0
          %421 = vst [vmem:[#allocation2 + $0x10] sm:$0xff] 0.0
          %422 = vst [vmem:[#allocation2 + $0x18] sm:$0xff] 0.0
        $region56: #{tpu_custom_call.1} parent=39 // pred_fallthru
          _
        %v423 = vld [vmem:[%s402] sm:$0xf]
        %v424 = vld [vmem:[%s402 + $0x4] sm:$0xf]
        %v425 = vld [vmem:[%s402 + $0x8] sm:$0xf]
        %v426 = vld [vmem:[%s402 + $0xc] sm:$0xf]
        %v427 = vld [vmem:[%s330] sm:$0xf]
        %v428 = vld [vmem:[%s330 + $0x4] sm:$0xf]
        %v429 = vld [vmem:[%s330 + $0x8] sm:$0xf]
        %v430 = vld [vmem:[%s330 + $0xc] sm:$0xf]
        %v431 = vld [vmem:[%s330 + $0x10] sm:$0xf]
        %v432 = vld [vmem:[%s330 + $0x14] sm:$0xf]
        %v433 = vld [vmem:[%s330 + $0x18] sm:$0xf]
        %v434 = vld [vmem:[%s330 + $0x1c] sm:$0xf]
        %v435 = vld [vmem:[%s330 + $0x20] sm:$0xf]
        %v436 = vld [vmem:[%s330 + $0x24] sm:$0xf]
        %v437 = vld [vmem:[%s330 + $0x28] sm:$0xf]
        %v438 = vld [vmem:[%s330 + $0x2c] sm:$0xf]
        %v439 = vld [vmem:[%s330 + $0x30] sm:$0xf]
        %v440 = vld [vmem:[%s330 + $0x34] sm:$0xf]
        %v441 = vld [vmem:[%s330 + $0x38] sm:$0xf]
        %v442 = vld [vmem:[%s330 + $0x3c] sm:$0xf]
        %v447 = vunpack.c.l.b16 %v423
        %v448 = vunpack.c.l.b16 %v424
        %v449 = vunpack.c.l.b16 %v425
        %v450 = vunpack.c.l.b16 %v426
        %v451 = vpack.c.b16 %v448, %v447
        %v452 = vpack.c.b16 %v450, %v449
        %v471 = vunpack.c.l.b16 %v427
        %v472 = vunpack.c.l.b16 %v428
        %v473 = vunpack.c.l.b16 %v429
        %v474 = vunpack.c.l.b16 %v430
        %v475 = vunpack.c.l.b16 %v431
        %v476 = vunpack.c.l.b16 %v432
        %v477 = vunpack.c.l.b16 %v433
        %v478 = vunpack.c.l.b16 %v434
        %v479 = vunpack.c.l.b16 %v435
        %v480 = vunpack.c.l.b16 %v436
        %v481 = vunpack.c.l.b16 %v437
        %v482 = vunpack.c.l.b16 %v438
        %v483 = vunpack.c.l.b16 %v439
        %v484 = vunpack.c.l.b16 %v440
        %v485 = vunpack.c.l.b16 %v441
        %v486 = vunpack.c.l.b16 %v442
        %v487 = vpack.c.b16 %v472, %v471
        %v488 = vpack.c.b16 %v474, %v473
        %v489 = vpack.c.b16 %v476, %v475
        %v490 = vpack.c.b16 %v478, %v477
        %v491 = vpack.c.b16 %v480, %v479
        %v492 = vpack.c.b16 %v482, %v481
        %v493 = vpack.c.b16 %v484, %v483
        %v494 = vpack.c.b16 %v486, %v485
        %503 = vmatpush.bf16.msra.mxu0 %v494
        %504 = vmatpush.bf16.msra.mxu0 %v493
        %505 = vmatpush.bf16.msra.mxu0 %v492
        %506 = vmatpush.bf16.msra.mxu0 %v491
        %507 = vmatpush.bf16.msra.mxu0 %v490
        %508 = vmatpush.bf16.msra.mxu0 %v489
        %509 = vmatpush.bf16.msra.mxu0 %v488
        %510 = vmatpush.bf16.msra.mxu0 %v487
        %511 = vmatmul.bf16.gmra.mxu0 %v451
        %v512 = vpop.f32.mrf.mxu0
        %v513 = vadd.f32 0.0, %v512
        %v514 = vpop.f32.mrf.mxu0
        %v515 = vadd.f32 0.0, %v514
        %516 = vmatmul.bf16.gmra.mxu0 %v452
        %v517 = vpop.f32.mrf.mxu0
        %v518 = vadd.f32 0.0, %v517
        %v519 = vpop.f32.mrf.mxu0
        %v520 = vadd.f32 0.0, %v519
        %521 = vdwg.mxu0
        %v522 = vld [vmem:[%s340] sm:$0xf]
        %v523 = vld [vmem:[%s340 + $0x4] sm:$0xf]
        %v524 = vld [vmem:[%s340 + $0x8] sm:$0xf]
        %v525 = vld [vmem:[%s340 + $0xc] sm:$0xf]
        %v526 = vld [vmem:[%s340 + $0x10] sm:$0xf]
        %v527 = vld [vmem:[%s340 + $0x14] sm:$0xf]
        %v528 = vld [vmem:[%s340 + $0x18] sm:$0xf]
        %v529 = vld [vmem:[%s340 + $0x1c] sm:$0xf]
        %v530 = vld [vmem:[%s340 + $0x20] sm:$0xf]
        %v531 = vld [vmem:[%s340 + $0x24] sm:$0xf]
        %v532 = vld [vmem:[%s340 + $0x28] sm:$0xf]
        %v533 = vld [vmem:[%s340 + $0x2c] sm:$0xf]
        %v534 = vld [vmem:[%s340 + $0x30] sm:$0xf]
        %v535 = vld [vmem:[%s340 + $0x34] sm:$0xf]
        %v536 = vld [vmem:[%s340 + $0x38] sm:$0xf]
        %v537 = vld [vmem:[%s340 + $0x3c] sm:$0xf]
        %v554 = vunpack.c.l.b16 %v522
        %v555 = vunpack.c.l.b16 %v523
        %v556 = vunpack.c.l.b16 %v524
        %v557 = vunpack.c.l.b16 %v525
        %v558 = vunpack.c.l.b16 %v526
        %v559 = vunpack.c.l.b16 %v527
        %v560 = vunpack.c.l.b16 %v528
        %v561 = vunpack.c.l.b16 %v529
        %v562 = vunpack.c.l.b16 %v530
        %v563 = vunpack.c.l.b16 %v531
        %v564 = vunpack.c.l.b16 %v532
        %v565 = vunpack.c.l.b16 %v533
        %v566 = vunpack.c.l.b16 %v534
        %v567 = vunpack.c.l.b16 %v535
        %v568 = vunpack.c.l.b16 %v536
        %v569 = vunpack.c.l.b16 %v537
        %v570 = vpack.c.b16 %v555, %v554
        %v571 = vpack.c.b16 %v557, %v556
        %v572 = vpack.c.b16 %v559, %v558
        %v573 = vpack.c.b16 %v561, %v560
        %v574 = vpack.c.b16 %v563, %v562
        %v575 = vpack.c.b16 %v565, %v564
        %v576 = vpack.c.b16 %v567, %v566
        %v577 = vpack.c.b16 %v569, %v568
        %586 = vmatpush.bf16.msra.mxu0 %v577
        %587 = vmatpush.bf16.msra.mxu0 %v576
        %588 = vmatpush.bf16.msra.mxu0 %v575
        %589 = vmatpush.bf16.msra.mxu0 %v574
        %590 = vmatpush.bf16.msra.mxu0 %v573
        %591 = vmatpush.bf16.msra.mxu0 %v572
        %592 = vmatpush.bf16.msra.mxu0 %v571
        %593 = vmatpush.bf16.msra.mxu0 %v570
        %594 = vmatmul.bf16.gmra.mxu0 %v451
        %v595 = vpop.f32.mrf.mxu0
        %v596 = vadd.f32 0.0, %v595
        %v597 = vpop.f32.mrf.mxu0
        %v598 = vadd.f32 0.0, %v597
        %599 = vmatmul.bf16.gmra.mxu0 %v452
        %v600 = vpop.f32.mrf.mxu0
        %v601 = vadd.f32 0.0, %v600
        %v602 = vpop.f32.mrf.mxu0
        %v603 = vadd.f32 0.0, %v602
        %604 = vdwg.mxu0
        %v605 = vxor.u32 %v513, 2147483648
        %v606 = vxor.u32 %v515, 2147483648
        %v607 = vxor.u32 %v518, 2147483648
        %v608 = vxor.u32 %v520, 2147483648
        %v609 = vmul.f32 %v605, 1.442695
        %v610 = vpow.pop %v609
        %v611 = vmul.f32 %v606, 1.442695
        %v612 = vpow.pop %v611
        %v613 = vmul.f32 %v607, 1.442695
        %v614 = vpow.pop %v613
        %v615 = vmul.f32 %v608, 1.442695
        %v616 = vpow.pop %v615
        %v617 = vadd.f32 %v610, 1.0
        %v618 = vadd.f32 %v612, 1.0
        %v619 = vadd.f32 %v614, 1.0
        %v620 = vadd.f32 %v616, 1.0
        %v621 = vrcp.pop %v617
        %v622 = vmul.f32 %v617, %v621
        %v623 = vsub.f32 1.0, %v622
        %v624 = vmul.f32 %v621, %v623
        %v625 = vadd.f32 %v621, %v624
        %vm626 = vweird.f32 %v617
        %vm627 = vweird.f32 %v621
        %vm628 = vmor %vm626, %vm627
        %v629 = vsel %vm628, %v621, %v625
        %v630 = vand.u32 2147483647, %v617
        %vm631 = vcmp.eq.f32.partialorder %v630, 8.507059e+37
        %v632 = vand.u32 %v617, 2147483648
        %v633 = vor.u32 1.1754944e-38, %v632
        %v634 = vsel %vm631, %v633, %v629
        %v635 = vmul.f32 1.0, %v634
        %v636 = vrcp.pop %v618
        %v637 = vmul.f32 %v618, %v636
        %v638 = vsub.f32 1.0, %v637
        %v639 = vmul.f32 %v636, %v638
        %v640 = vadd.f32 %v636, %v639
        %vm641 = vweird.f32 %v618
        %vm642 = vweird.f32 %v636
        %vm643 = vmor %vm641, %vm642
        %v644 = vsel %vm643, %v636, %v640
        %v645 = vand.u32 2147483647, %v618
        %vm646 = vcmp.eq.f32.partialorder %v645, 8.507059e+37
        %v647 = vand.u32 %v618, 2147483648
        %v648 = vor.u32 1.1754944e-38, %v647
        %v649 = vsel %vm646, %v648, %v644
        %v650 = vmul.f32 1.0, %v649
        %v651 = vrcp.pop %v619
        %v652 = vmul.f32 %v619, %v651
        %v653 = vsub.f32 1.0, %v652
        %v654 = vmul.f32 %v651, %v653
        %v655 = vadd.f32 %v651, %v654
        %vm656 = vweird.f32 %v619
        %vm657 = vweird.f32 %v651
        %vm658 = vmor %vm656, %vm657
        %v659 = vsel %vm658, %v651, %v655
        %v660 = vand.u32 2147483647, %v619
        %vm661 = vcmp.eq.f32.partialorder %v660, 8.507059e+37
        %v662 = vand.u32 %v619, 2147483648
        %v663 = vor.u32 1.1754944e-38, %v662
        %v664 = vsel %vm661, %v663, %v659
        %v665 = vmul.f32 1.0, %v664
        %v666 = vrcp.pop %v620
        %v667 = vmul.f32 %v620, %v666
        %v668 = vsub.f32 1.0, %v667
        %v669 = vmul.f32 %v666, %v668
        %v670 = vadd.f32 %v666, %v669
        %vm671 = vweird.f32 %v620
        %vm672 = vweird.f32 %v666
        %vm673 = vmor %vm671, %vm672
        %v674 = vsel %vm673, %v666, %v670
        %v675 = vand.u32 2147483647, %v620
        %vm676 = vcmp.eq.f32.partialorder %v675, 8.507059e+37
        %v677 = vand.u32 %v620, 2147483648
        %v678 = vor.u32 1.1754944e-38, %v677
        %v679 = vsel %vm676, %v678, %v674
        %v680 = vmul.f32 1.0, %v679
        %v681 = vmul.f32 %v513, %v635
        %v682 = vmul.f32 %v515, %v650
        %v683 = vmul.f32 %v518, %v665
        %v684 = vmul.f32 %v520, %v680
        %v685 = vmul.f32 %v681, %v596
        %v686 = vmul.f32 %v682, %v598
        %v687 = vmul.f32 %v683, %v601
        %v688 = vmul.f32 %v684, %v603
        %v689 = vpack.c.bf16 %v686, %v685
        %v690 = vpack.c.bf16 %v688, %v687
        %v691 = vld [vmem:[#allocation2] sm:$0xff]
        %v692 = vld [vmem:[#allocation2 + $0x8] sm:$0xff]
        %v693 = vld [vmem:[#allocation2 + $0x10] sm:$0xff]
        %v694 = vld [vmem:[#allocation2 + $0x18] sm:$0xff]
        %v695 = vld [vmem:[%s350] sm:$0xf]
        %v696 = vld [vmem:[%s350 + $0x4] sm:$0xf]
        %v697 = vld [vmem:[%s350 + $0x8] sm:$0xf]
        %v698 = vld [vmem:[%s350 + $0xc] sm:$0xf]
        %v699 = vld [vmem:[%s350 + $0x10] sm:$0xf]
        %v700 = vld [vmem:[%s350 + $0x14] sm:$0xf]
        %v701 = vld [vmem:[%s350 + $0x18] sm:$0xf]
        %v702 = vld [vmem:[%s350 + $0x1c] sm:$0xf]
        %v703 = vld [vmem:[%s350 + $0x20] sm:$0xf]
        %v704 = vld [vmem:[%s350 + $0x24] sm:$0xf]
        %v705 = vld [vmem:[%s350 + $0x28] sm:$0xf]
        %v706 = vld [vmem:[%s350 + $0x2c] sm:$0xf]
        %v707 = vld [vmem:[%s350 + $0x30] sm:$0xf]
        %v708 = vld [vmem:[%s350 + $0x34] sm:$0xf]
        %v709 = vld [vmem:[%s350 + $0x38] sm:$0xf]
        %v710 = vld [vmem:[%s350 + $0x3c] sm:$0xf]
        %v727 = vunpack.c.l.b16 %v695
        %v728 = vunpack.c.l.b16 %v696
        %v729 = vunpack.c.l.b16 %v697
        %v730 = vunpack.c.l.b16 %v698
        %v731 = vunpack.c.l.b16 %v699
        %v732 = vunpack.c.l.b16 %v700
        %v733 = vunpack.c.l.b16 %v701
        %v734 = vunpack.c.l.b16 %v702
        %v735 = vunpack.c.l.b16 %v703
        %v736 = vunpack.c.l.b16 %v704
        %v737 = vunpack.c.l.b16 %v705
        %v738 = vunpack.c.l.b16 %v706
        %v739 = vunpack.c.l.b16 %v707
        %v740 = vunpack.c.l.b16 %v708
        %v741 = vunpack.c.l.b16 %v709
        %v742 = vunpack.c.l.b16 %v710
        %v743 = vpack.c.b16 %v728, %v727
        %v744 = vpack.c.b16 %v730, %v729
        %v745 = vpack.c.b16 %v732, %v731
        %v746 = vpack.c.b16 %v734, %v733
        %v747 = vpack.c.b16 %v736, %v735
        %v748 = vpack.c.b16 %v738, %v737
        %v749 = vpack.c.b16 %v740, %v739
        %v750 = vpack.c.b16 %v742, %v741
        %759 = vmatpush.bf16.msra.mxu0 %v750
        %760 = vmatpush.bf16.msra.mxu0 %v749
        %761 = vmatpush.bf16.msra.mxu0 %v748
        %762 = vmatpush.bf16.msra.mxu0 %v747
        %763 = vmatpush.bf16.msra.mxu0 %v746
        %764 = vmatpush.bf16.msra.mxu0 %v745
        %765 = vmatpush.bf16.msra.mxu0 %v744
        %766 = vmatpush.bf16.msra.mxu0 %v743
        %767 = vmatmul.bf16.gmra.mxu0 %v689
        %v768 = vpop.f32.mrf.mxu0
        %v769 = vadd.f32 0.0, %v768
        %v770 = vpop.f32.mrf.mxu0
        %v771 = vadd.f32 0.0, %v770
        %772 = vmatmul.bf16.gmra.mxu0 %v690
        %v773 = vpop.f32.mrf.mxu0
        %v774 = vadd.f32 0.0, %v773
        %v775 = vpop.f32.mrf.mxu0
        %v776 = vadd.f32 0.0, %v775
        %777 = vdwg.mxu0
        %v778 = vadd.f32 %v691, %v769
        %v779 = vadd.f32 %v692, %v771
        %v780 = vadd.f32 %v693, %v774
        %v781 = vadd.f32 %v694, %v776
        %782 = vst [vmem:[#allocation2] sm:$0xff] %v778
        %783 = vst [vmem:[#allocation2 + $0x8] sm:$0xff] %v779
        %784 = vst [vmem:[#allocation2 + $0x10] sm:$0xff] %v780
        %785 = vst [vmem:[#allocation2 + $0x18] sm:$0xff] %v781
        %p786 = scmp.eq.s32.totalorder %s39, 1
        // Predicated region
        $region57: #{tpu_custom_call.1} parent=39 // pred_check
          %p787 = pneg %p786
        $region58: #{tpu_custom_call.1} parent=39 // pred_check_branch
          %789 = sbr.rel (%p787) target = $region60
        $region59: #{tpu_custom_call.1} parent=39 // pred_region
          %v790 = vld [vmem:[#allocation2] sm:$0xff]
          %v791 = vld [vmem:[#allocation2 + $0x8] sm:$0xff]
          %v792 = vld [vmem:[#allocation2 + $0x10] sm:$0xff]
          %v793 = vld [vmem:[#allocation2 + $0x18] sm:$0xff]
          %v794 = vld [vmem:[%s408] sm:$0xff]
          %v795 = vld [vmem:[%s408 + $0x8] sm:$0xff]
          %v796 = vld [vmem:[%s408 + $0x10] sm:$0xff]
          %v797 = vld [vmem:[%s408 + $0x18] sm:$0xff]
          %799 = vset.pattern.permute.xlu0 0
          %800 = vperm.xlu0 %799, %v794
          %v801 = vpop.permute.xlu0 %800
          %804 = vset.pattern.permute.xlu0 0
          %805 = vperm.xlu0 %804, %v795
          %v806 = vpop.permute.xlu0 %805
          %809 = vset.pattern.permute.xlu0 0
          %810 = vperm.xlu0 %809, %v796
          %v811 = vpop.permute.xlu0 %810
          %814 = vset.pattern.permute.xlu0 0
          %815 = vperm.xlu0 %814, %v797
          %v816 = vpop.permute.xlu0 %815
          %v818 = vmul.f32 %v790, %v801
          %v819 = vmul.f32 %v791, %v806
          %v820 = vmul.f32 %v792, %v811
          %v821 = vmul.f32 %v793, %v816
          %822 = vst [vmem:[%s397] sm:$0xff] %v818
          %823 = vst [vmem:[%s397 + $0x8] sm:$0xff] %v819
          %824 = vst [vmem:[%s397 + $0x10] sm:$0xff] %v820
          %825 = vst [vmem:[%s397 + $0x18] sm:$0xff] %v821
        $region60: #{tpu_custom_call.1} parent=39 // pred_fallthru
          _
        %s826 = sand.u32 %s196, 1
        %s827 = scalar_lea.sflag [#allocation7], %s826
        %s828 = sand.u32 %s196, 1
        %s829 = smul.addr %s828, 32
        %s830 = scalar_lea.vmem [#allocation11], %s829
        // Predicated region
        $region61: #{tpu_custom_call.1} parent=39 // pred_check
          %p831 = pneg %p206
        $region62: #{tpu_custom_call.1} parent=39 // pred_check_branch
          %833 = sbr.rel (%p831) target = $region64
        $region63: #{tpu_custom_call.1} parent=39 // pred_region
          %s834 = smul.u32 4, %s38
          %836 = vsyncadd %s827, 0
          %s837 = smul.addr %s834, 8
          %s838 = scalar_lea.hbm %s6, %s837
          %s839 = sshll.u32 %s830, 4
          %s840 = int_to_ptr.vmem [resolvable:$true] %s839
          %s841 = sshll.u32 %s838, 4
          %s842 = int_to_ptr.hbm [resolvable:$true] %s841
          %847 = dma.vmem_to_hbm [thread:$0]  %s840, 512, %s842, %s827, 128, 128, 8
        $region64: #{tpu_custom_call.1} parent=39 // pred_fallthru
          _
      $region40: #{tpu_custom_call.1} parent=5 // pred_fallthru
        _
      %p848 = scmp.le.s32.totalorder 2, %s29
      // Predicated region
      $region65: #{tpu_custom_call.1} parent=5 // pred_check
        %p849 = pneg %p848
      $region66: #{tpu_custom_call.1} parent=5 // pred_check_branch
        %851 = sbr.rel (%p849) target = $region68
      $region67: #{tpu_custom_call.1} parent=5 // pred_region
        %s852 = ssub.s32 %s29, 2
        // Predicated region
        $region69: #{tpu_custom_call.1} parent=67 // pred_check
          %p853 = pneg %p212
        $region70: #{tpu_custom_call.1} parent=67 // pred_check_branch
          %855 = sbr.rel (%p853) target = $region72
        $region71: #{tpu_custom_call.1} parent=67 // pred_region
          %s856 = sand.u32 %s197, 1
          %s857 = scalar_lea.sflag [#allocation7], %s856
          %s858 = sand.u32 %s197, 1
          %s859 = smul.addr %s858, 32
          %s860 = scalar_lea.vmem [#allocation11], %s859
          %862 = dma.done %s857, 512
        $region72: #{tpu_custom_call.1} parent=67 // pred_fallthru
          _
      $region68: #{tpu_custom_call.1} parent=5 // pred_fallthru
        _
    $region6: #{tpu_custom_call.1} parent=1 // loop_footer
      %s33 = sadd.s32 1, %s29
    $region7: #{tpu_custom_call.1} parent=1 // loop_footer_branch
      %28 = sbr.rel target = $region3
    $region8: #{tpu_custom_call.1} parent=1 // loop_exit
      _
    %863 = vsyncpa [#allocation6], 1
    %s864 = scalar_lea.sflag [#allocation6], 1
    %865 = vsyncpa %s864, 1
    %866 = vsyncpa [#allocation9], 1
    %s867 = scalar_lea.sflag [#allocation9], 1
    %868 = vsyncpa %s867, 1
    %869 = vsyncpa [#allocation7], 1
    %s870 = scalar_lea.sflag [#allocation7], 1
    %871 = vsyncpa %s870, 1

</llo_original>
